<compile_context>
chip_gen: v7x
topology: tpu7x:2x2x1
jax: 0.10.0
libtpu: 0.0.40
codegen_flags: <defaults>
</compile_context>

<pallas_src>
import functools
import numpy as np
import jax
import jax.numpy as jnp
from jax.experimental import pallas as pl
from jax.experimental.pallas import tpu as pltpu


# ----------------------------- parameter setup -----------------------------
def _hann_window(win_length):
    # librosa.filters.get_window('hann', win_length, fftbins=True) (periodic)
    n = np.arange(win_length)
    return 0.5 - 0.5 * np.cos(2.0 * np.pi * n / win_length)


def _make_stft_weights(n_fft, win_length):
    """Deterministic conv weights: windowed DFT matrix (real / imag), (n_fft, F)."""
    out_channels = n_fft // 2 + 1
    window = _hann_window(win_length)
    lpad = (n_fft - win_length) // 2                      # librosa.util.pad_center
    window = np.pad(window, (lpad, n_fft - win_length - lpad))
    n = np.arange(n_fft)[:, None]
    f = np.arange(out_channels)[None, :]
    ang = 2.0 * np.pi * n * f / n_fft                     # W[n,f] = exp(-i*ang)
    w_real = (np.cos(ang) * window[:, None]).astype(np.float32)
    w_imag = (-np.sin(ang) * window[:, None]).astype(np.float32)
    return w_real, w_imag


def _round_up(x, m):
    return ((x + m - 1) // m) * m


# -------------------------------- kernel ------------------------------------
def _stft_kernel(x_ref, w_ref, o_ref, *, tt, ratio):
    """One (signal row, frame tile) step.

    x_ref : (1, S_pad, hop)       hop-blocked signal row (VMEM resident)
    w_ref : (ratio, hop, Fpad2)   fused windowed-DFT weights [real | imag | 0-pad]
    o_ref : (1, tt, Fpad2)        fused real/imag spectrogram tile
    """
    j = pl.program_id(1)
    t0 = pl.multiple_of(j * tt, tt)
    # frame[t, q*hop + r] = x[(t + q)*hop + r]  -> ratio accumulating matmuls,
    # each contracting a hop-wide K slice (K = hop >= 128 for realistic n_fft).
    acc = jnp.dot(x_ref[0, pl.ds(t0, tt), :], w_ref[0],
                  preferred_element_type=jnp.float32)
    for q in range(1, ratio):
        piece = x_ref[0, pl.ds(t0 + q, tt), :]            # (tt, hop)
        acc = acc + jnp.dot(piece, w_ref[q],
                            preferred_element_type=jnp.float32)
    o_ref[0] = acc


# ------------------------------ wrapper --------------------------------------
def stft_forward(x, *, n_fft, hop_length=None, win_length=None, center=True,
                 pad_mode="reflect", tt_max=256):
    """x: (B, C, L) float32 -> (real, imag), each (B, C*(n_fft//2+1), T)."""
    if win_length is None:
        win_length = n_fft
    if hop_length is None:
        hop_length = win_length // 4
    hop = int(hop_length)
    # TODO(synk): hop values that do not divide n_fft would need per-frame
    # dynamic slices inside the kernel; the module's defaults (hop = n_fft//4)
    # always satisfy this.
    assert n_fft % hop == 0, "in-kernel framing requires hop_length | n_fft"
    ratio = n_fft // hop

    B, C, L = x.shape
    BC = B * C
    F_bins = n_fft // 2 + 1
    Fpad2 = _round_up(2 * F_bins, 128)                    # lane-dense fused output

    # Fused weight: [real | imag | zero pad] along the frequency axis, then
    # reshaped so w_cat[q] is the K-slice matching sample offsets q*hop..+hop.
    w_real, w_imag = _make_stft_weights(n_fft, win_length)
    w_cat = np.zeros((n_fft, Fpad2), np.float32)
    w_cat[:, :F_bins] = w_real
    w_cat[:, F_bins:2 * F_bins] = w_imag
    w_cat = jnp.asarray(w_cat.reshape(ratio, hop, Fpad2))

    if center:
        mode = "reflect" if pad_mode == "reflect" else "constant"
        x = jnp.pad(x, ((0, 0), (0, 0), (n_fft // 2, n_fft // 2)), mode=mode)
    Lp = x.shape[-1]
    T = (Lp - n_fft) // hop + 1

    # Frame-tile size: large (up to tt_max) and a multiple of 8.
    tt = min(tt_max, _round_up(T, 8))
    T_pad = _round_up(T, tt)
    n_t_tiles = T_pad // tt

    # Hop-blocked signal, zero-padded so every (padded) frame read is in range.
    S_pad = max(T_pad + ratio - 1, -(-Lp // hop))
    total = S_pad * hop
    x = jnp.pad(x, ((0, 0), (0, 0), (0, total - Lp)))
    x_blocks = x.reshape(BC, S_pad, hop).astype(jnp.float32)

    kernel = functools.partial(_stft_kernel, tt=tt, ratio=ratio)
    cost = pl.CostEstimate(
        flops=2 * BC * T_pad * n_fft * Fpad2,
        transcendentals=0,
        bytes_accessed=4 * (x_blocks.size + w_cat.size + BC * T_pad * Fpad2),
    )

    out = pl.pallas_call(
        kernel,
        out_shape=jax.ShapeDtypeStruct((BC, T_pad, Fpad2), jnp.float32),
        grid_spec=pltpu.PrefetchScalarGridSpec(
            num_scalar_prefetch=0,
            grid=(BC, n_t_tiles),
            in_specs=[
                # Full signal row; block index is constant in j, so it stays
                # VMEM-resident across the frame-tile axis (no re-DMA).
                pl.BlockSpec((1, S_pad, hop), lambda bc, j: (bc, 0, 0)),
                # Invariant fused weights (DMA'd once).
                pl.BlockSpec((ratio, hop, Fpad2), lambda bc, j: (0, 0, 0)),
            ],
            out_specs=pl.BlockSpec((1, tt, Fpad2), lambda bc, j: (bc, j, 0)),
        ),
        compiler_params=pltpu.CompilerParams(
            dimension_semantics=("parallel", "parallel")),
        cost_estimate=cost,
    )(x_blocks, w_cat)

    # Unpack: drop frame/lane padding, split real/imag, go to (B, C*F, T).
    # (Final (T,F)->(F,T) transpose kept in plain JAX to match torch layout.)
    out = out[:, :T, :2 * F_bins].reshape(B, C, T, 2 * F_bins)
    real = jnp.transpose(out[..., :F_bins], (0, 1, 3, 2)).reshape(B, C * F_bins, T)
    imag = jnp.transpose(out[..., F_bins:], (0, 1, 3, 2)).reshape(B, C * F_bins, T)
    return real, imag


# --------------------------------- main ---------------------------------------
if __name__ == "__main__":
    key = jax.random.PRNGKey(0)
    B, C, L = 2, 2, 256                 # batch, in_chans, data_length
    n_fft, hop = 128, 32                # small STFT consistent with the module
    x = jax.random.normal(key, (B, C, L), dtype=jnp.float32)

    real, imag = stft_forward(x, n_fft=n_fft, hop_length=hop)
    jax.block_until_ready((real, imag))

    # Pure-JAX reference (same math, no Pallas) for a sanity check.
    wr, wi = _make_stft_weights(n_fft, n_fft)
    xp = jnp.pad(x, ((0, 0), (0, 0), (n_fft // 2, n_fft // 2)), mode="reflect")
    T = (xp.shape[-1] - n_fft) // hop + 1
    idx = jnp.arange(T)[:, None] * hop + jnp.arange(n_fft)[None, :]
    fr = xp[:, :, idx]                                      # (B, C, T, n_fft)
    F_bins = n_fft // 2 + 1
    rr = jnp.einsum("bctn,nf->bcft", fr, jnp.asarray(wr)).reshape(B, C * F_bins, T)
    ii = jnp.einsum("bctn,nf->bcft", fr, jnp.asarray(wi)).reshape(B, C * F_bins, T)

    assert real.shape == (B, C * F_bins, T) and imag.shape == (B, C * F_bins, T)
    assert jnp.allclose(real, rr, atol=1e-3, rtol=1e-3)
    assert jnp.allclose(imag, ii, atol=1e-3, rtol=1e-3)
    print("KERNEL_OK")
</pallas_src>

<mosaic_0001>
module attributes {stable_mosaic.version = 11 : i64} {
  func.func @_stft_kernel(%arg0: i32, %arg1: i32, %arg2: memref<1x19x32xf32, #tpu.memory_space<vmem>>, %arg3: memref<4x32x256xf32, #tpu.memory_space<vmem>>, %arg4: memref<1x16x256xf32, #tpu.memory_space<vmem>>) attributes {dimension_semantics = [#tpu.dimension_semantics<parallel>, #tpu.dimension_semantics<parallel>], iteration_bounds = array<i64: 4, 1>, scalar_prefetch = 0 : i64, scratch_operands = 0 : i64, tpu.core_type = #tpu.core_type<tc>, window_params = [{transform_indices = @transform_0, window_bounds = array<i64: 1, 19, 32>}, {pipeline_mode = #tpu.pipeline_mode<synchronous>, transform_indices = @transform_1, window_bounds = array<i64: 4, 32, 256>}, {transform_indices = @transform_2, window_bounds = array<i64: 1, 16, 256>}]} {
    %c16_i32 = arith.constant 16 : i32
    %0 = arith.muli %arg1, %c16_i32 : i32
    %1 = tpu.assume_multiple %0, 16 : i32
    %c0 = arith.constant 0 : index
    %2 = arith.index_cast %1 : i32 to index
    %c0_0 = arith.constant 0 : index
    %3 = vector.load %arg2[%c0, %2, %c0_0] : memref<1x19x32xf32, #tpu.memory_space<vmem>>, vector<1x16x32xf32>
    %4 = vector.shape_cast %3 : vector<1x16x32xf32> to vector<16x32xf32>
    %c0_1 = arith.constant 0 : index
    %c0_2 = arith.constant 0 : index
    %c0_3 = arith.constant 0 : index
    %5 = vector.load %arg3[%c0_1, %c0_2, %c0_3] : memref<4x32x256xf32, #tpu.memory_space<vmem>>, vector<1x32x256xf32>
    %6 = vector.shape_cast %5 : vector<1x32x256xf32> to vector<32x256xf32>
    %cst = arith.constant dense<0.000000e+00> : vector<16x256xf32>
    %7 = tpu.matmul %4, %6, %cst {dimension_numbers = #tpu.dot_dimension_numbers<[1], [0], [0], [1], [0, 0, 1, 1], [], []>} : vector<16x32xf32>, vector<32x256xf32>, vector<16x256xf32> -> vector<16x256xf32>
    %c1_i32 = arith.constant 1 : i32
    %8 = arith.addi %1, %c1_i32 : i32
    %c0_4 = arith.constant 0 : index
    %9 = arith.index_cast %8 : i32 to index
    %c0_5 = arith.constant 0 : index
    %10 = vector.load %arg2[%c0_4, %9, %c0_5] : memref<1x19x32xf32, #tpu.memory_space<vmem>>, vector<1x16x32xf32>
    %11 = vector.shape_cast %10 : vector<1x16x32xf32> to vector<16x32xf32>
    %c1 = arith.constant 1 : index
    %c0_6 = arith.constant 0 : index
    %c0_7 = arith.constant 0 : index
    %12 = vector.load %arg3[%c1, %c0_6, %c0_7] : memref<4x32x256xf32, #tpu.memory_space<vmem>>, vector<1x32x256xf32>
    %13 = vector.shape_cast %12 : vector<1x32x256xf32> to vector<32x256xf32>
    %cst_8 = arith.constant dense<0.000000e+00> : vector<16x256xf32>
    %14 = tpu.matmul %11, %13, %cst_8 {dimension_numbers = #tpu.dot_dimension_numbers<[1], [0], [0], [1], [0, 0, 1, 1], [], []>} : vector<16x32xf32>, vector<32x256xf32>, vector<16x256xf32> -> vector<16x256xf32>
    %15 = arith.addf %7, %14 : vector<16x256xf32>
    %c2_i32 = arith.constant 2 : i32
    %16 = arith.addi %1, %c2_i32 : i32
    %c0_9 = arith.constant 0 : index
    %17 = arith.index_cast %16 : i32 to index
    %c0_10 = arith.constant 0 : index
    %18 = vector.load %arg2[%c0_9, %17, %c0_10] : memref<1x19x32xf32, #tpu.memory_space<vmem>>, vector<1x16x32xf32>
    %19 = vector.shape_cast %18 : vector<1x16x32xf32> to vector<16x32xf32>
    %c2 = arith.constant 2 : index
    %c0_11 = arith.constant 0 : index
    %c0_12 = arith.constant 0 : index
    %20 = vector.load %arg3[%c2, %c0_11, %c0_12] : memref<4x32x256xf32, #tpu.memory_space<vmem>>, vector<1x32x256xf32>
    %21 = vector.shape_cast %20 : vector<1x32x256xf32> to vector<32x256xf32>
    %cst_13 = arith.constant dense<0.000000e+00> : vector<16x256xf32>
    %22 = tpu.matmul %19, %21, %cst_13 {dimension_numbers = #tpu.dot_dimension_numbers<[1], [0], [0], [1], [0, 0, 1, 1], [], []>} : vector<16x32xf32>, vector<32x256xf32>, vector<16x256xf32> -> vector<16x256xf32>
    %23 = arith.addf %15, %22 : vector<16x256xf32>
    %c3_i32 = arith.constant 3 : i32
    %24 = arith.addi %1, %c3_i32 : i32
    %c0_14 = arith.constant 0 : index
    %25 = arith.index_cast %24 : i32 to index
    %c0_15 = arith.constant 0 : index
    %26 = vector.load %arg2[%c0_14, %25, %c0_15] : memref<1x19x32xf32, #tpu.memory_space<vmem>>, vector<1x16x32xf32>
    %27 = vector.shape_cast %26 : vector<1x16x32xf32> to vector<16x32xf32>
    %c3 = arith.constant 3 : index
    %c0_16 = arith.constant 0 : index
    %c0_17 = arith.constant 0 : index
    %28 = vector.load %arg3[%c3, %c0_16, %c0_17] : memref<4x32x256xf32, #tpu.memory_space<vmem>>, vector<1x32x256xf32>
    %29 = vector.shape_cast %28 : vector<1x32x256xf32> to vector<32x256xf32>
    %cst_18 = arith.constant dense<0.000000e+00> : vector<16x256xf32>
    %30 = tpu.matmul %27, %29, %cst_18 {dimension_numbers = #tpu.dot_dimension_numbers<[1], [0], [0], [1], [0, 0, 1, 1], [], []>} : vector<16x32xf32>, vector<32x256xf32>, vector<16x256xf32> -> vector<16x256xf32>
    %31 = arith.addf %23, %30 : vector<16x256xf32>
    %c0_19 = arith.constant 0 : index
    %c0_20 = arith.constant 0 : index
    %c0_21 = arith.constant 0 : index
    %32 = vector.load %arg4[%c0_19, %c0_20, %c0_21] : memref<1x16x256xf32, #tpu.memory_space<vmem>>, vector<1x16x256xf32>
    %33 = vector.shape_cast %32 : vector<1x16x256xf32> to vector<16x256xf32>
    %34 = vector.shape_cast %31 : vector<16x256xf32> to vector<1x16x256xf32>
    tpu.vector_store %arg4[%c0_19, %c0_20, %c0_21], %34 {strides = array<i32>} : memref<1x16x256xf32, #tpu.memory_space<vmem>>, vector<1x16x256xf32>,
    return
  }
  func.func @transform_0(%arg0: i32, %arg1: i32) -> (i32, i32, i32) {
    %c0_i32 = arith.constant 0 : i32
    %c0_i32_0 = arith.constant 0 : i32
    %c0_i32_1 = arith.constant 0 : i32
    return %arg0, %c0_i32, %c0_i32_0 : i32, i32, i32
  }
  func.func @transform_1(%arg0: i32, %arg1: i32) -> (i32, i32, i32) {
    %c0_i32 = arith.constant 0 : i32
    %c0_i32_0 = arith.constant 0 : i32
    %c0_i32_1 = arith.constant 0 : i32
    %c0_i32_2 = arith.constant 0 : i32
    return %c0_i32, %c0_i32_0, %c0_i32_1 : i32, i32, i32
  }
  func.func @transform_2(%arg0: i32, %arg1: i32) -> (i32, i32, i32) {
    %c0_i32 = arith.constant 0 : i32
    %c0_i32_0 = arith.constant 0 : i32
    return %arg0, %arg1, %c0_i32 : i32, i32, i32
  }
}

</mosaic_0001>

<llo_original>
// kernel: tpu_custom_call.1
$region0: #{tpu_custom_call.1}
  #allocation0 [shape = 'u32[]', space=smem, size = 0x4, offset = 0x4, fixed_abs, tag = 'smem constant byte address 0x4 - core index']
  #allocation1 [shape = 'u32[144,128]{1,0:T(1,128)}', space=vmem, size = 0x12000, scoped, tag = 'internal scratch']
  %s0 = inlined_call_operand.vmem [shape: f32[4,19,32], index: 0, kind: input, shape index: {}]
  %s1 = inlined_call_operand.hbm [shape: f32[4,32,256], index: 1, kind: input, shape index: {}]
  %s2 = inlined_call_operand.hbm [shape: f32[4,16,256], index: 2, kind: output, shape index: {}]
  %s3 = sld [smem:[#allocation0]]
  $region45: #{tpu_custom_call.1} parent=0
    _
  %s5 = ssub.s32 1, %s3
  %s6 = scalar_select 0, %s5, %s3
  $region1: #{tpu_custom_call.1} parent=0
    #allocation2 [shape = 'u8[131072]{0}', space=vmem, size = 0x20000, scoped, tag = 'input window, operand 1, single buffered']
    #allocation3 [shape = 's32[2]{0}', space=sflag, size = 0x8, scoped, tag = 'scoped memory for tpu_custom_call.1']
    #allocation4 [shape = 's32[2]{0}', space=sflag, size = 0x8, scoped, tag = 'scoped memory for tpu_custom_call.1']
    #allocation5 [shape = 'u8[32768]{0}', space=vmem, size = 0x8000, scoped, tag = 'output window, operand 0']
    %7 = vsyncpa [#allocation3], 0
    %8 = vsyncpa [#allocation4], 0
    %s9 = scalar_lea.sflag [#allocation4], 1
    %10 = vsyncpa %s9, 0
    loop: start=0, step=1, limit=6
    $region2: #{tpu_custom_call.1} parent=1 // loop_pre_header
      _
    $region3: #{tpu_custom_call.1} parent=1 // loop_header
      %s12 = sphi 0, %s16
      %p13 = scmp.ge.s32.totalorder %s12, 6
      %s19 = sphi 0, %s31
      %s20 = sphi 0, %s27
      %s21 = sphi 0, %s19
      %s22 = sphi 0, %s20
      %s23 = sphi 0, %s21
      %s24 = sphi 0, %s22
      %s34 = sphi 0, %s36
      %s37 = sphi 0, %s34
      %s38 = sphi 0, %s37
      %s54 = sphi 0, %s38
      %s58 = sphi 0, %s58
      %s60 = sphi 0, %s58
      %s61 = sphi 0, %s60
      %s75 = sphi 0, %s61
      %s83 = sphi 0, %s85
      %s86 = sphi 0, %s83
      %s87 = sphi 0, %s86
      %s103 = sphi 0, %s87
    $region4: #{tpu_custom_call.1} parent=1 // loop_header_branch
      %15 = sbr.rel (%p13) target = $region8
    $region5: #{tpu_custom_call.1} parent=1 // loop_body
      %s17 = ssub.s32 %s12, 1
      %s18 = ssub.s32 %s12, 2
      %s25 = sadd.s32 1, %s20
      %p26 = scmp.ge.s32.totalorder %s25, 1
      %s27 = scalar_select %p26, 0, %s25
      %s28 = sadd.s32 1, %s19
      %s29 = scalar_select %p26, %s28, %s19
      %p30 = scmp.ge.s32.totalorder %s29, 4
      %s31 = scalar_select %p30, 0, %s29
      %s32 = ssub.s32 %s19, %s31
      %p33 = scmp.eq.s32.totalorder %s32, 0
      %s35 = sadd.s32 %s34, 1
      %s36 = scalar_select %p33, %s34, %s35
      %p39 = pneg %p33
      %p40 = scmp.eq.s32.totalorder %s12, 3
      %p41 = por %p39, %p40
      %p42 = scmp.ne.s32.totalorder %s34, %s37
      %p43 = scmp.eq.s32.totalorder %s12, 0
      %p44 = por %p42, %p43
      %p45 = scmp.ne.s32.totalorder %s34, %s37
      %p46 = scmp.eq.s32.totalorder %s17, 3
      %p47 = por %p45, %p46
      %p48 = scmp.ne.s32.totalorder %s37, %s38
      %p49 = scmp.eq.s32.totalorder %s17, 0
      %p50 = por %p48, %p49
      %p51 = scmp.ne.s32.totalorder %s37, %s38
      %p52 = scmp.eq.s32.totalorder %s18, 3
      %p53 = por %p51, %p52
      %p55 = scmp.ne.s32.totalorder %s38, %s54
      %p56 = scmp.eq.s32.totalorder %s18, 0
      %p57 = por %p55, %p56
      %s59 = sadd.s32 %s58, 1
      %p62 = scmp.eq.s32.totalorder %s12, 3
      %p63 = scmp.ne.s32.totalorder %s58, %s60
      %p64 = scmp.eq.s32.totalorder %s12, 0
      %p65 = por %p63, %p64
      %p66 = scmp.ne.s32.totalorder %s58, %s60
      %p67 = scmp.eq.s32.totalorder %s17, 3
      %p68 = por %p66, %p67
      %p69 = scmp.ne.s32.totalorder %s60, %s61
      %p70 = scmp.eq.s32.totalorder %s17, 0
      %p71 = por %p69, %p70
      %p72 = scmp.ne.s32.totalorder %s60, %s61
      %p73 = scmp.eq.s32.totalorder %s18, 3
      %p74 = por %p72, %p73
      %p76 = scmp.ne.s32.totalorder %s61, %s75
      %p77 = scmp.eq.s32.totalorder %s18, 0
      %p78 = por %p76, %p77
      %s79 = ssub.s32 %s19, %s31
      %s80 = ssub.s32 %s20, %s27
      %s81 = sor.u32 %s79, %s80
      %p82 = scmp.eq.s32.totalorder %s81, 0
      %s84 = sadd.s32 %s83, 1
      %s85 = scalar_select %p82, %s83, %s84
      %p88 = pneg %p82
      %p89 = scmp.eq.s32.totalorder %s12, 3
      %p90 = por %p88, %p89
      %p91 = scmp.ne.s32.totalorder %s83, %s86
      %p92 = scmp.eq.s32.totalorder %s12, 0
      %p93 = por %p91, %p92
      %p94 = scmp.ne.s32.totalorder %s83, %s86
      %p95 = scmp.eq.s32.totalorder %s17, 3
      %p96 = por %p94, %p95
      %p97 = scmp.ne.s32.totalorder %s86, %s87
      %p98 = scmp.eq.s32.totalorder %s17, 0
      %p99 = por %p97, %p98
      %p100 = scmp.ne.s32.totalorder %s86, %s87
      %p101 = scmp.eq.s32.totalorder %s18, 3
      %p102 = por %p100, %p101
      %p104 = scmp.ne.s32.totalorder %s87, %s103
      %p105 = scmp.eq.s32.totalorder %s18, 0
      %p106 = por %p104, %p105
      %p107 = scmp.le.s32.totalorder 1, %s12
      %p108 = scmp.lt.s32.totalorder %s12, 5
      %p109 = pnand %p107, %p108
      %p110 = pneg %p109
      // Predicated region
      $region9: #{tpu_custom_call.1} parent=5 // pred_check
        _
      $region10: #{tpu_custom_call.1} parent=5 // pred_check_branch
        %112 = sbr.rel (%p109) target = $region12
      $region11: #{tpu_custom_call.1} parent=5 // pred_region
        %s113 = ssub.s32 %s12, 1
        // Predicated region
        $region13: #{tpu_custom_call.1} parent=11 // pred_check
          %p114 = pneg %p71
        $region14: #{tpu_custom_call.1} parent=11 // pred_check_branch
          %116 = sbr.rel (%p114) target = $region16
        $region15: #{tpu_custom_call.1} parent=11 // pred_region
          %s118 = ssub.s32 4096, 4096
          %119 = vsyncadd [#allocation3], %s118
          %s120 = sshll.u32 [#allocation2], 4
          %s121 = int_to_ptr.vmem [resolvable:$true] %s120
          %126 = dma.hbm_to_vmem [thread:$0]  %s1, 4096, %s121, [#allocation3], 256, 256, 16
        $region16: #{tpu_custom_call.1} parent=11 // pred_fallthru
          _
      $region12: #{tpu_custom_call.1} parent=5 // pred_fallthru
        _
      %p127 = scmp.lt.s32.totalorder %s12, 4
      // Predicated region
      $region17: #{tpu_custom_call.1} parent=5 // pred_check
        %p128 = pneg %p127
      $region18: #{tpu_custom_call.1} parent=5 // pred_check_branch
        %130 = sbr.rel (%p128) target = $region20
      $region19: #{tpu_custom_call.1} parent=5 // pred_region
        // Predicated region
        $region21: #{tpu_custom_call.1} parent=19 // pred_check
          %p131 = pneg %p44
        $region22: #{tpu_custom_call.1} parent=19 // pred_check_branch
          %133 = sbr.rel (%p131) target = $region24
        $region23: #{tpu_custom_call.1} parent=19 // pred_region
          %p134 = scmp.lt.s32.totalorder %s19, 3
          %s135 = scalar_select %p134, %s19, 3
          %s136 = smul.addr %s135, 3
          %s137 = smul.addr %s136, 8
          %s138 = scalar_lea.vmem %s0, %s137
        $region24: #{tpu_custom_call.1} parent=19 // pred_fallthru
          _
      $region20: #{tpu_custom_call.1} parent=5 // pred_fallthru
        _
      %p139 = scmp.le.s32.totalorder 1, %s12
      %p140 = scmp.lt.s32.totalorder %s12, 5
      %p141 = pnand %p139, %p140
      %p142 = pneg %p141
      // Predicated region
      $region25: #{tpu_custom_call.1} parent=5 // pred_check
        _
      $region26: #{tpu_custom_call.1} parent=5 // pred_check_branch
        %144 = sbr.rel (%p141) target = $region28
      $region27: #{tpu_custom_call.1} parent=5 // pred_region
        %s145 = ssub.s32 %s12, 1
        // Predicated region
        $region29: #{tpu_custom_call.1} parent=27 // pred_check
          %p146 = pneg %p71
        $region30: #{tpu_custom_call.1} parent=27 // pred_check_branch
          %148 = sbr.rel (%p146) target = $region32
        $region31: #{tpu_custom_call.1} parent=27 // pred_region
          %149 = dma.done [#allocation3], 4096
        $region32: #{tpu_custom_call.1} parent=27 // pred_fallthru
          _
        %p150 = scmp.lt.s32.totalorder %s21, 3
        %s151 = scalar_select %p150, %s21, 3
        %s152 = smul.addr %s151, 3
        %s153 = smul.addr %s152, 8
        %s154 = scalar_lea.vmem %s0, %s153
        %p155 = pneg %p50
        %p156 = pneg %p47
        %p157 = pneg %p71
        %p158 = pneg %p68
        %p159 = pneg %p99
        %p160 = pneg %p96
        %s161 = sand.u32 %s86, 1
        %s162 = scalar_lea.sflag [#allocation4], %s161
        %s163 = sand.u32 %s86, 1
        %s164 = smul.addr %s163, 32
        %s165 = scalar_lea.vmem [#allocation5], %s164
        %p166 = scmp.lt.s32.totalorder %s21, 3
        %s167 = scalar_select %p166, %s21, 3
        %s168 = smul.addr %s167, 3
        %s169 = smul.addr %s168, 8
        %s170 = scalar_lea.vmem %s0, %s169
        %s171 = smul.u32 2, %s22
        %s172 = smul.u32 %s22, 16
        %s173 = scalar_lea.vmem %s170, %s172
        %v174 = vld [vmem:[%s173] sm:$0xff]
        %v175 = vld [vmem:[%s173 + $0x8] sm:$0xff]
        %v176 = vld [vmem:[#allocation2] sm:$0xff]
        %v177 = vld [vmem:[#allocation2 + $0x8] sm:$0xff]
        %v178 = vld [vmem:[#allocation2 + $0x10] sm:$0xff]
        %v179 = vld [vmem:[#allocation2 + $0x18] sm:$0xff]
        %v180 = vld [vmem:[#allocation2 + $0x20] sm:$0xff]
        %v181 = vld [vmem:[#allocation2 + $0x28] sm:$0xff]
        %v182 = vld [vmem:[#allocation2 + $0x30] sm:$0xff]
        %v183 = vld [vmem:[#allocation2 + $0x38] sm:$0xff]
        %s184 = sadd.s32 %s172, 1
        %s185 = scalar_lea.vmem %s170, %s184
        %v186 = vld [vmem:[%s185] sm:$0xff]
        %v187 = vld [vmem:[%s185 + $0x8] sm:$0xff]
        %s188 = scalar_lea.vmem [#allocation2], 64
        %v189 = vld [vmem:[%s188] sm:$0xff]
        %v190 = vld [vmem:[%s188 + $0x8] sm:$0xff]
        %v191 = vld [vmem:[%s188 + $0x10] sm:$0xff]
        %v192 = vld [vmem:[%s188 + $0x18] sm:$0xff]
        %v193 = vld [vmem:[%s188 + $0x20] sm:$0xff]
        %v194 = vld [vmem:[%s188 + $0x28] sm:$0xff]
        %v195 = vld [vmem:[%s188 + $0x30] sm:$0xff]
        %v196 = vld [vmem:[%s188 + $0x38] sm:$0xff]
        %vm197 = vcmask 261120
        %v199 = vsel %vm197, %v186, 0
        %v202 = vsel %vm197, %v187, 0
        %204 = vmatprep.subr.mxu0 %v190
        %205 = vmatpush1.msra.mxu0 %v189
        %206 = vmatprep.subr.mxu0 %v192
        %207 = vmatpush1.msra.mxu0 %v191
        %208 = vmatprep.subr.mxu0 %v194
        %209 = vmatpush1.msra.mxu0 %v193
        %210 = vmatprep.subr.mxu0 %v196
        %211 = vmatpush1.msra.mxu0 %v195
        %212 = vmatprep.subr.mxu0 0.0
        %213 = vmatpush1.msra.mxu0 0.0
        %214 = vmatprep.subr.mxu0 0.0
        %215 = vmatpush1.msra.mxu0 0.0
        %216 = vmatprep.subr.mxu0 0.0
        %217 = vmatpush1.msra.mxu0 0.0
        %218 = vmatprep.subr.mxu0 0.0
        %219 = vmatpush1.msra.mxu0 0.0
        %220 = vmatprep.subr.mxu0 0.0
        %221 = vmatpush1.msra.mxu0 0.0
        %222 = vmatprep.subr.mxu0 0.0
        %223 = vmatpush1.msra.mxu0 0.0
        %224 = vmatprep.subr.mxu0 0.0
        %225 = vmatpush1.msra.mxu0 0.0
        %226 = vmatprep.subr.mxu0 0.0
        %227 = vmatpush1.msra.mxu0 0.0
        %228 = vmatprep.subr.mxu0 0.0
        %229 = vmatpush1.msra.mxu0 0.0
        %230 = vmatprep.subr.mxu0 0.0
        %231 = vmatpush1.msra.mxu0 0.0
        %232 = vmatprep.subr.mxu0 0.0
        %233 = vmatpush1.msra.mxu0 0.0
        %234 = vmatprep.subr.mxu0 0.0
        %235 = vmatpush1.msra.mxu0 0.0
        %236 = vmatprep.subr.mxu0 0.0
        %237 = vmatpush1.msra.mxu0 0.0
        %238 = vmatprep.subr.mxu0 0.0
        %239 = vmatpush1.msra.mxu0 0.0
        %240 = vmatprep.subr.mxu0 0.0
        %241 = vmatpush1.msra.mxu0 0.0
        %242 = vmatprep.subr.mxu0 0.0
        %243 = vmatpush1.msra.mxu0 0.0
        %244 = vmatprep.subr.mxu0 0.0
        %245 = vmatpush1.msra.mxu0 0.0
        %246 = vmatprep.subr.mxu0 0.0
        %247 = vmatpush1.msra.mxu0 0.0
        %248 = vmatprep.subr.mxu0 0.0
        %249 = vmatpush1.msra.mxu0 0.0
        %250 = vmatprep.subr.mxu0 0.0
        %251 = vmatpush1.msra.mxu0 0.0
        %252 = vmatprep.subr.mxu0 0.0
        %253 = vmatpush1.msra.mxu0 0.0
        %254 = vmatprep.subr.mxu0 0.0
        %255 = vmatpush1.msra.mxu0 0.0
        %256 = vmatprep.subr.mxu0 0.0
        %257 = vmatpush1.msra.mxu0 0.0
        %258 = vmatprep.subr.mxu0 0.0
        %259 = vmatpush1.msra.mxu0 0.0
        %260 = vmatprep.subr.mxu0 0.0
        %261 = vmatpush1.msra.mxu0 0.0
        %262 = vmatprep.subr.mxu0 0.0
        %263 = vmatpush1.msra.mxu0 0.0
        %264 = vmatprep.subr.mxu0 0.0
        %265 = vmatpush1.msra.mxu0 0.0
        %266 = vmatprep.subr.mxu0 0.0
        %267 = vmatpush1.msra.mxu0 0.0
        %268 = vmatprep.mubr.f32.mxu0 0.0
        %269 = vmatmul.mubr.f32.gmra.mrb[0].mxu0 %v199
        %v270 = vpop.f32.mrb[0].mxu0
        %v271 = vadd.f32 0.0, %v270
        %v272 = vpop.f32.mrb[0].mxu0
        %v273 = vadd.f32 0.0, %v272
        %274 = vmatprep.mubr.f32.mxu0 0.0
        %275 = vmatmul.mubr.f32.gmra.mrb[0].mxu0 %v202
        %v276 = vpop.f32.mrb[0].mxu0
        %v277 = vadd.f32 0.0, %v276
        %v278 = vpop.f32.mrb[0].mxu0
        %v279 = vadd.f32 0.0, %v278
        %280 = vdwg.mxu0
        %v282 = vsel %vm197, %v174, 0
        %v285 = vsel %vm197, %v175, 0
        %287 = vmatprep.subr.mxu0 %v177
        %288 = vmatpush1.msra.mxu0 %v176
        %289 = vmatprep.subr.mxu0 %v179
        %290 = vmatpush1.msra.mxu0 %v178
        %291 = vmatprep.subr.mxu0 %v181
        %292 = vmatpush1.msra.mxu0 %v180
        %293 = vmatprep.subr.mxu0 %v183
        %294 = vmatpush1.msra.mxu0 %v182
        %295 = vmatprep.subr.mxu0 0.0
        %296 = vmatpush1.msra.mxu0 0.0
        %297 = vmatprep.subr.mxu0 0.0
        %298 = vmatpush1.msra.mxu0 0.0
        %299 = vmatprep.subr.mxu0 0.0
        %300 = vmatpush1.msra.mxu0 0.0
        %301 = vmatprep.subr.mxu0 0.0
        %302 = vmatpush1.msra.mxu0 0.0
        %303 = vmatprep.subr.mxu0 0.0
        %304 = vmatpush1.msra.mxu0 0.0
        %305 = vmatprep.subr.mxu0 0.0
        %306 = vmatpush1.msra.mxu0 0.0
        %307 = vmatprep.subr.mxu0 0.0
        %308 = vmatpush1.msra.mxu0 0.0
        %309 = vmatprep.subr.mxu0 0.0
        %310 = vmatpush1.msra.mxu0 0.0
        %311 = vmatprep.subr.mxu0 0.0
        %312 = vmatpush1.msra.mxu0 0.0
        %313 = vmatprep.subr.mxu0 0.0
        %314 = vmatpush1.msra.mxu0 0.0
        %315 = vmatprep.subr.mxu0 0.0
        %316 = vmatpush1.msra.mxu0 0.0
        %317 = vmatprep.subr.mxu0 0.0
        %318 = vmatpush1.msra.mxu0 0.0
        %319 = vmatprep.subr.mxu0 0.0
        %320 = vmatpush1.msra.mxu0 0.0
        %321 = vmatprep.subr.mxu0 0.0
        %322 = vmatpush1.msra.mxu0 0.0
        %323 = vmatprep.subr.mxu0 0.0
        %324 = vmatpush1.msra.mxu0 0.0
        %325 = vmatprep.subr.mxu0 0.0
        %326 = vmatpush1.msra.mxu0 0.0
        %327 = vmatprep.subr.mxu0 0.0
        %328 = vmatpush1.msra.mxu0 0.0
        %329 = vmatprep.subr.mxu0 0.0
        %330 = vmatpush1.msra.mxu0 0.0
        %331 = vmatprep.subr.mxu0 0.0
        %332 = vmatpush1.msra.mxu0 0.0
        %333 = vmatprep.subr.mxu0 0.0
        %334 = vmatpush1.msra.mxu0 0.0
        %335 = vmatprep.subr.mxu0 0.0
        %336 = vmatpush1.msra.mxu0 0.0
        %337 = vmatprep.subr.mxu0 0.0
        %338 = vmatpush1.msra.mxu0 0.0
        %339 = vmatprep.subr.mxu0 0.0
        %340 = vmatpush1.msra.mxu0 0.0
        %341 = vmatprep.subr.mxu0 0.0
        %342 = vmatpush1.msra.mxu0 0.0
        %343 = vmatprep.subr.mxu0 0.0
        %344 = vmatpush1.msra.mxu0 0.0
        %345 = vmatprep.subr.mxu0 0.0
        %346 = vmatpush1.msra.mxu0 0.0
        %347 = vmatprep.subr.mxu0 0.0
        %348 = vmatpush1.msra.mxu0 0.0
        %349 = vmatprep.subr.mxu0 0.0
        %350 = vmatpush1.msra.mxu0 0.0
        %351 = vmatprep.mubr.f32.mxu0 0.0
        %352 = vmatmul.mubr.f32.gmra.mrb[0].mxu0 %v282
        %v353 = vpop.f32.mrb[0].mxu0
        %v354 = vadd.f32 %v271, %v353
        %v355 = vpop.f32.mrb[0].mxu0
        %v356 = vadd.f32 %v273, %v355
        %357 = vmatprep.mubr.f32.mxu0 0.0
        %358 = vmatmul.mubr.f32.gmra.mrb[0].mxu0 %v285
        %v359 = vpop.f32.mrb[0].mxu0
        %v360 = vadd.f32 %v277, %v359
        %v361 = vpop.f32.mrb[0].mxu0
        %v362 = vadd.f32 %v279, %v361
        %363 = vdwg.mxu0
        %s364 = sadd.s32 %s172, 2
        %s365 = scalar_lea.vmem %s170, %s364
        %v366 = vld [vmem:[%s365] sm:$0xff]
        %v367 = vld [vmem:[%s365 + $0x8] sm:$0xff]
        %s368 = scalar_lea.vmem [#allocation2], 128
        %v369 = vld [vmem:[%s368] sm:$0xff]
        %v370 = vld [vmem:[%s368 + $0x8] sm:$0xff]
        %v371 = vld [vmem:[%s368 + $0x10] sm:$0xff]
        %v372 = vld [vmem:[%s368 + $0x18] sm:$0xff]
        %v373 = vld [vmem:[%s368 + $0x20] sm:$0xff]
        %v374 = vld [vmem:[%s368 + $0x28] sm:$0xff]
        %v375 = vld [vmem:[%s368 + $0x30] sm:$0xff]
        %v376 = vld [vmem:[%s368 + $0x38] sm:$0xff]
        %v378 = vsel %vm197, %v366, 0
        %v381 = vsel %vm197, %v367, 0
        %383 = vmatprep.subr.mxu0 %v370
        %384 = vmatpush1.msra.mxu0 %v369
        %385 = vmatprep.subr.mxu0 %v372
        %386 = vmatpush1.msra.mxu0 %v371
        %387 = vmatprep.subr.mxu0 %v374
        %388 = vmatpush1.msra.mxu0 %v373
        %389 = vmatprep.subr.mxu0 %v376
        %390 = vmatpush1.msra.mxu0 %v375
        %391 = vmatprep.subr.mxu0 0.0
        %392 = vmatpush1.msra.mxu0 0.0
        %393 = vmatprep.subr.mxu0 0.0
        %394 = vmatpush1.msra.mxu0 0.0
        %395 = vmatprep.subr.mxu0 0.0
        %396 = vmatpush1.msra.mxu0 0.0
        %397 = vmatprep.subr.mxu0 0.0
        %398 = vmatpush1.msra.mxu0 0.0
        %399 = vmatprep.subr.mxu0 0.0
        %400 = vmatpush1.msra.mxu0 0.0
        %401 = vmatprep.subr.mxu0 0.0
        %402 = vmatpush1.msra.mxu0 0.0
        %403 = vmatprep.subr.mxu0 0.0
        %404 = vmatpush1.msra.mxu0 0.0
        %405 = vmatprep.subr.mxu0 0.0
        %406 = vmatpush1.msra.mxu0 0.0
        %407 = vmatprep.subr.mxu0 0.0
        %408 = vmatpush1.msra.mxu0 0.0
        %409 = vmatprep.subr.mxu0 0.0
        %410 = vmatpush1.msra.mxu0 0.0
        %411 = vmatprep.subr.mxu0 0.0
        %412 = vmatpush1.msra.mxu0 0.0
        %413 = vmatprep.subr.mxu0 0.0
        %414 = vmatpush1.msra.mxu0 0.0
        %415 = vmatprep.subr.mxu0 0.0
        %416 = vmatpush1.msra.mxu0 0.0
        %417 = vmatprep.subr.mxu0 0.0
        %418 = vmatpush1.msra.mxu0 0.0
        %419 = vmatprep.subr.mxu0 0.0
        %420 = vmatpush1.msra.mxu0 0.0
        %421 = vmatprep.subr.mxu0 0.0
        %422 = vmatpush1.msra.mxu0 0.0
        %423 = vmatprep.subr.mxu0 0.0
        %424 = vmatpush1.msra.mxu0 0.0
        %425 = vmatprep.subr.mxu0 0.0
        %426 = vmatpush1.msra.mxu0 0.0
        %427 = vmatprep.subr.mxu0 0.0
        %428 = vmatpush1.msra.mxu0 0.0
        %429 = vmatprep.subr.mxu0 0.0
        %430 = vmatpush1.msra.mxu0 0.0
        %431 = vmatprep.subr.mxu0 0.0
        %432 = vmatpush1.msra.mxu0 0.0
        %433 = vmatprep.subr.mxu0 0.0
        %434 = vmatpush1.msra.mxu0 0.0
        %435 = vmatprep.subr.mxu0 0.0
        %436 = vmatpush1.msra.mxu0 0.0
        %437 = vmatprep.subr.mxu0 0.0
        %438 = vmatpush1.msra.mxu0 0.0
        %439 = vmatprep.subr.mxu0 0.0
        %440 = vmatpush1.msra.mxu0 0.0
        %441 = vmatprep.subr.mxu0 0.0
        %442 = vmatpush1.msra.mxu0 0.0
        %443 = vmatprep.subr.mxu0 0.0
        %444 = vmatpush1.msra.mxu0 0.0
        %445 = vmatprep.subr.mxu0 0.0
        %446 = vmatpush1.msra.mxu0 0.0
        %447 = vmatprep.mubr.f32.mxu0 0.0
        %448 = vmatmul.mubr.f32.gmra.mrb[0].mxu0 %v378
        %v449 = vpop.f32.mrb[0].mxu0
        %v450 = vadd.f32 0.0, %v449
        %v451 = vpop.f32.mrb[0].mxu0
        %v452 = vadd.f32 0.0, %v451
        %453 = vmatprep.mubr.f32.mxu0 0.0
        %454 = vmatmul.mubr.f32.gmra.mrb[0].mxu0 %v381
        %v455 = vpop.f32.mrb[0].mxu0
        %v456 = vadd.f32 0.0, %v455
        %v457 = vpop.f32.mrb[0].mxu0
        %v458 = vadd.f32 0.0, %v457
        %459 = vdwg.mxu0
        %v460 = vadd.f32 %v354, %v450
        %v461 = vadd.f32 %v356, %v452
        %v462 = vadd.f32 %v360, %v456
        %v463 = vadd.f32 %v362, %v458
        %s464 = sadd.s32 %s172, 3
        %s465 = scalar_lea.vmem %s170, %s464
        %v466 = vld [vmem:[%s465] sm:$0xff]
        %v467 = vld [vmem:[%s465 + $0x8] sm:$0xff]
        %s468 = scalar_lea.vmem [#allocation2], 192
        %v469 = vld [vmem:[%s468] sm:$0xff]
        %v470 = vld [vmem:[%s468 + $0x8] sm:$0xff]
        %v471 = vld [vmem:[%s468 + $0x10] sm:$0xff]
        %v472 = vld [vmem:[%s468 + $0x18] sm:$0xff]
        %v473 = vld [vmem:[%s468 + $0x20] sm:$0xff]
        %v474 = vld [vmem:[%s468 + $0x28] sm:$0xff]
        %v475 = vld [vmem:[%s468 + $0x30] sm:$0xff]
        %v476 = vld [vmem:[%s468 + $0x38] sm:$0xff]
        %v478 = vsel %vm197, %v466, 0
        %v481 = vsel %vm197, %v467, 0
        %483 = vmatprep.subr.mxu0 %v470
        %484 = vmatpush1.msra.mxu0 %v469
        %485 = vmatprep.subr.mxu0 %v472
        %486 = vmatpush1.msra.mxu0 %v471
        %487 = vmatprep.subr.mxu0 %v474
        %488 = vmatpush1.msra.mxu0 %v473
        %489 = vmatprep.subr.mxu0 %v476
        %490 = vmatpush1.msra.mxu0 %v475
        %491 = vmatprep.subr.mxu0 0.0
        %492 = vmatpush1.msra.mxu0 0.0
        %493 = vmatprep.subr.mxu0 0.0
        %494 = vmatpush1.msra.mxu0 0.0
        %495 = vmatprep.subr.mxu0 0.0
        %496 = vmatpush1.msra.mxu0 0.0
        %497 = vmatprep.subr.mxu0 0.0
        %498 = vmatpush1.msra.mxu0 0.0
        %499 = vmatprep.subr.mxu0 0.0
        %500 = vmatpush1.msra.mxu0 0.0
        %501 = vmatprep.subr.mxu0 0.0
        %502 = vmatpush1.msra.mxu0 0.0
        %503 = vmatprep.subr.mxu0 0.0
        %504 = vmatpush1.msra.mxu0 0.0
        %505 = vmatprep.subr.mxu0 0.0
        %506 = vmatpush1.msra.mxu0 0.0
        %507 = vmatprep.subr.mxu0 0.0
        %508 = vmatpush1.msra.mxu0 0.0
        %509 = vmatprep.subr.mxu0 0.0
        %510 = vmatpush1.msra.mxu0 0.0
        %511 = vmatprep.subr.mxu0 0.0
        %512 = vmatpush1.msra.mxu0 0.0
        %513 = vmatprep.subr.mxu0 0.0
        %514 = vmatpush1.msra.mxu0 0.0
        %515 = vmatprep.subr.mxu0 0.0
        %516 = vmatpush1.msra.mxu0 0.0
        %517 = vmatprep.subr.mxu0 0.0
        %518 = vmatpush1.msra.mxu0 0.0
        %519 = vmatprep.subr.mxu0 0.0
        %520 = vmatpush1.msra.mxu0 0.0
        %521 = vmatprep.subr.mxu0 0.0
        %522 = vmatpush1.msra.mxu0 0.0
        %523 = vmatprep.subr.mxu0 0.0
        %524 = vmatpush1.msra.mxu0 0.0
        %525 = vmatprep.subr.mxu0 0.0
        %526 = vmatpush1.msra.mxu0 0.0
        %527 = vmatprep.subr.mxu0 0.0
        %528 = vmatpush1.msra.mxu0 0.0
        %529 = vmatprep.subr.mxu0 0.0
        %530 = vmatpush1.msra.mxu0 0.0
        %531 = vmatprep.subr.mxu0 0.0
        %532 = vmatpush1.msra.mxu0 0.0
        %533 = vmatprep.subr.mxu0 0.0
        %534 = vmatpush1.msra.mxu0 0.0
        %535 = vmatprep.subr.mxu0 0.0
        %536 = vmatpush1.msra.mxu0 0.0
        %537 = vmatprep.subr.mxu0 0.0
        %538 = vmatpush1.msra.mxu0 0.0
        %539 = vmatprep.subr.mxu0 0.0
        %540 = vmatpush1.msra.mxu0 0.0
        %541 = vmatprep.subr.mxu0 0.0
        %542 = vmatpush1.msra.mxu0 0.0
        %543 = vmatprep.subr.mxu0 0.0
        %544 = vmatpush1.msra.mxu0 0.0
        %545 = vmatprep.subr.mxu0 0.0
        %546 = vmatpush1.msra.mxu0 0.0
        %547 = vmatprep.mubr.f32.mxu0 0.0
        %548 = vmatmul.mubr.f32.gmra.mrb[0].mxu0 %v478
        %v549 = vpop.f32.mrb[0].mxu0
        %v550 = vadd.f32 0.0, %v549
        %v551 = vpop.f32.mrb[0].mxu0
        %v552 = vadd.f32 0.0, %v551
        %553 = vmatprep.mubr.f32.mxu0 0.0
        %554 = vmatmul.mubr.f32.gmra.mrb[0].mxu0 %v481
        %v555 = vpop.f32.mrb[0].mxu0
        %v556 = vadd.f32 0.0, %v555
        %v557 = vpop.f32.mrb[0].mxu0
        %v558 = vadd.f32 0.0, %v557
        %559 = vdwg.mxu0
        %v560 = vadd.f32 %v460, %v550
        %v561 = vadd.f32 %v461, %v552
        %v562 = vadd.f32 %v462, %v556
        %v563 = vadd.f32 %v463, %v558
        %564 = vst [vmem:[%s165] sm:$0xff] %v560
        %565 = vst [vmem:[%s165 + $0x8] sm:$0xff] %v561
        %566 = vst [vmem:[%s165 + $0x10] sm:$0xff] %v562
        %567 = vst [vmem:[%s165 + $0x18] sm:$0xff] %v563
        %s568 = sand.u32 %s86, 1
        %s569 = scalar_lea.sflag [#allocation4], %s568
        %s570 = sand.u32 %s86, 1
        %s571 = smul.addr %s570, 32
        %s572 = scalar_lea.vmem [#allocation5], %s571
        // Predicated region
        $region33: #{tpu_custom_call.1} parent=27 // pred_check
          %p573 = pneg %p96
        $region34: #{tpu_custom_call.1} parent=27 // pred_check_branch
          %575 = sbr.rel (%p573) target = $region36
        $region35: #{tpu_custom_call.1} parent=27 // pred_region
          %s576 = smul.u32 2, %s22
          %s578 = ssub.s32 512, 512
          %579 = vsyncadd %s569, %s578
          %s580 = smul.addr %s576, 2
          %s581 = smul.addr %s21, 4
          %s582 = sadd.s32 %s580, %s581
          %s583 = smul.addr %s582, 128
          %s584 = scalar_lea.hbm %s2, %s583
          %s585 = sshll.u32 %s572, 4
          %s586 = int_to_ptr.vmem [resolvable:$true] %s585
          %591 = dma.vmem_to_hbm [thread:$0]  %s586, 512, %s584, %s569, 256, 256, 16
        $region36: #{tpu_custom_call.1} parent=27 // pred_fallthru
          _
      $region28: #{tpu_custom_call.1} parent=5 // pred_fallthru
        _
      %p592 = scmp.le.s32.totalorder 2, %s12
      // Predicated region
      $region37: #{tpu_custom_call.1} parent=5 // pred_check
        %p593 = pneg %p592
      $region38: #{tpu_custom_call.1} parent=5 // pred_check_branch
        %595 = sbr.rel (%p593) target = $region40
      $region39: #{tpu_custom_call.1} parent=5 // pred_region
        %s596 = ssub.s32 %s12, 2
        // Predicated region
        $region41: #{tpu_custom_call.1} parent=39 // pred_check
          %p597 = pneg %p102
        $region42: #{tpu_custom_call.1} parent=39 // pred_check_branch
          %599 = sbr.rel (%p597) target = $region44
        $region43: #{tpu_custom_call.1} parent=39 // pred_region
          %s600 = sand.u32 %s87, 1
          %s601 = scalar_lea.sflag [#allocation4], %s600
          %s602 = sand.u32 %s87, 1
          %s603 = smul.addr %s602, 32
          %s604 = scalar_lea.vmem [#allocation5], %s603
          %605 = dma.done %s601, 512
        $region44: #{tpu_custom_call.1} parent=39 // pred_fallthru
          _
      $region40: #{tpu_custom_call.1} parent=5 // pred_fallthru
        _
    $region6: #{tpu_custom_call.1} parent=1 // loop_footer
      %s16 = sadd.s32 1, %s12
    $region7: #{tpu_custom_call.1} parent=1 // loop_footer_branch
      %11 = sbr.rel target = $region3
    $region8: #{tpu_custom_call.1} parent=1 // loop_exit
      _
    %606 = vsyncpa [#allocation3], 1
    %s607 = scalar_lea.sflag [#allocation3], 1
    %608 = vsyncpa %s607, 1
    %609 = vsyncpa [#allocation4], 1
    %s610 = scalar_lea.sflag [#allocation4], 1
    %611 = vsyncpa %s610, 1

</llo_original>
